<compile_context>
chip_gen: v6e
topology: v6e:2x2x1
jax: 0.10.0
libtpu: 0.0.40
codegen_flags: <defaults>
</compile_context>

<pallas_src>
import jax
import jax.numpy as jnp
from jax import lax
from jax.experimental import pallas as pl
from jax.experimental.pallas import tpu as pltpu


def _round_up(a, b):
    return (a + b - 1) // b * b


def _reflect_index(idx, width):
    if idx < 0:
        return -idx
    if idx >= width:
        return 2 * (width - 1) - idx
    return idx


def _boundary_overrides(W, K):
    """Static reflection fold-up table.

    For lane-shift s in [-PAD, PAD], the interior per-column weight is
    coef[s + PAD].  At the <= 2*PAD boundary columns of each row the
    contributing tap set changes (reflection re-uses in-row columns); return
    {s: {col: [taps]}} only where it differs from the interior default.
    """
    PAD = K // 2
    shifts = list(range(-PAD, PAD + 1))
    cols = sorted(set(list(range(min(PAD, W))) +
                      list(range(max(W - PAD, 0), W))))
    overrides = {s: {} for s in shifts}
    for w0 in cols:
        sel_map = {}
        for j in range(K):
            r = _reflect_index(w0 + j - PAD, W)
            sel_map.setdefault(r - w0, []).append(j)
        for s in shifts:
            taps = sel_map.get(s, [])
            if taps != [s + PAD]:
                overrides[s][w0] = taps
    return overrides


def _make_kernel(W, HW, K, G):
    PAD = K // 2
    shifts = list(range(-PAD, PAD + 1))
    overrides = _boundary_overrides(W, K)

    def kernel(s_ref, x_ref, o_ref):
        # s_ref: (N*G*K,) f32 gate scalars in SMEM (scalar prefetch)
        # x_ref / o_ref: (1, 1, TCg, HW) blocks, lane axis = flattened H*W
        n = pl.program_id(0)
        g = pl.program_id(1)
        base = (n * G + g) * K
        coefs = [s_ref[base + j] for j in range(K)]        # K SMEM scalar loads

        x = x_ref[0, 0]                                    # (TCg, HW) native dtype
        col = lax.broadcasted_iota(jnp.int32, (1, HW), 1) % W   # column within row

        acc = None
        for s in shifts:
            # Per-column weight for this lane shift: interior value is
            # coef[s+PAD]; boundary columns fold reflected taps (static table).
            w_vec = jnp.full((1, HW), coefs[s + PAD], dtype=jnp.float32)
            for w0, taps in overrides[s].items():
                ov = jnp.float32(0.0)
                for j in taps:
                    ov = ov + coefs[j]
                w_vec = jnp.where(col == w0, ov, w_vec)
            # rolled[p] == x[p + s]; wherever weight != 0 the read stays inside
            # the same row, so the wrap-around of the lane roll never leaks in.
            rolled = x if s == 0 else pltpu.roll(x, shift=(-s) % HW, axis=1)
            term = w_vec * rolled.astype(jnp.float32)
            acc = term if acc is None else acc + term
        o_ref[0, 0] = acc.astype(o_ref.dtype)              # single store per tile

    return kernel


def spatial_strip_att_pallas(x, conv_w, *, kernel=5, group=2):
    """x: (N, C, H, W); conv_w: (group*kernel, C, 1, 1). Returns (N, C, H, W)."""
    N, C, H, W = x.shape
    K, G = kernel, group
    PAD = K // 2
    assert C % G == 0, "channels must be divisible by group"
    assert W > PAD, "width must exceed kernel // 2 for reflection padding"
    Cg = C // G
    HW = H * W
    itemsize = x.dtype.itemsize

    # ---- gate: global average pool -> 1x1 conv (no bias) -> sigmoid (hoisted)
    pooled = jnp.mean(x, axis=(2, 3), dtype=jnp.float32)                # (N, C)
    wmat = conv_w.reshape(G * K, C).astype(jnp.float32)                 # (G*K, C)
    gate = jax.nn.sigmoid(pooled @ wmat.T).reshape(-1)                  # (N*G*K,)

    # ---- lane-dense view: (N, G, Cg, H*W); free reshape, no HBM pass
    x4 = x.reshape(N, G, Cg, HW)

    # ---- channel-tile choice against the PADDED VMEM footprint
    sub_align = {4: 8, 2: 16, 1: 32}.get(itemsize, 8)
    lane = _round_up(HW, 128)

    def footprint(tcg):
        blk = _round_up(tcg, sub_align) * lane * itemsize        # one buffer
        blk_f32 = _round_up(tcg, 8) * lane * 4                   # f32 accumulator
        # 2x double-buffered input + 2x output + ~2 live native copies
        # (loaded x + one rolled copy) + accumulator/headroom.
        return 6 * blk + 2 * blk_f32

    budget = 12 * 1024 * 1024                                    # safe on v5e/v7x
    cands = [d for d in range(sub_align, Cg + 1, sub_align) if Cg % d == 0]
    if Cg not in cands:
        cands.append(Cg)                                         # full dim always legal
    cands = sorted(set(cands))
    fitting = [c for c in cands if footprint(c) <= budget] or [cands[0]]
    n_outer = N * G
    stepped = [c for c in fitting if n_outer * (Cg // c) >= 8]   # keep 2 TCs busy (v7x)
    TCg = max(stepped) if stepped else max(fitting)
    # TODO(synk): for very large feature maps (H*W*8*itemsize > budget) also tile
    # the flattened H*W axis in multiples of 128*W rows.

    grid = (N, G, Cg // TCg)
    vmem_limit = int(min(max(footprint(TCg) + (2 << 20), 8 << 20), 32 << 20))

    out4 = pl.pallas_call(
        _make_kernel(W, HW, K, G),
        out_shape=jax.ShapeDtypeStruct((N, G, Cg, HW), x.dtype),
        grid_spec=pltpu.PrefetchScalarGridSpec(
            num_scalar_prefetch=1,
            grid=grid,
            in_specs=[pl.BlockSpec((1, 1, TCg, HW),
                                   lambda n, g, ci, gate_ref: (n, g, ci, 0))],
            out_specs=pl.BlockSpec((1, 1, TCg, HW),
                                   lambda n, g, ci, gate_ref: (n, g, ci, 0)),
        ),
        compiler_params=pltpu.CompilerParams(
            dimension_semantics=("parallel", "parallel", "parallel"),
            vmem_limit_bytes=vmem_limit),
        cost_estimate=pl.CostEstimate(
            flops=int(2 * K) * N * C * HW,
            transcendentals=0,
            bytes_accessed=2 * N * C * HW * itemsize),
    )(gate, x4)

    return out4.reshape(N, C, H, W)


def spatial_strip_att_reference(x, conv_w, *, kernel=5, group=2):
    """Pure-JAX replica of the PyTorch forward pass (for verification)."""
    n, c, h, w = x.shape
    k = kernel
    pad = k // 2
    pooled = jnp.mean(x, axis=(2, 3))                                      # (n, c)
    logits = jnp.einsum("oc,nc->no", conv_w.reshape(group * k, c), pooled)
    s = jax.nn.sigmoid(logits).reshape(n, group, 1, k, 1)
    xp = jnp.pad(x, ((0, 0), (0, 0), (0, 0), (pad, pad)), mode="reflect")
    cols = jnp.stack([xp[:, :, :, j:j + w] for j in range(k)], axis=2)     # (n,c,k,h,w)
    cols = cols.reshape(n, group, c // group, k, h * w)
    out = jnp.sum(cols * s, axis=3).reshape(n, c, h, w)
    return out


if __name__ == "__main__":
    key = jax.random.PRNGKey(0)
    kx, kw = jax.random.split(key)

    N, C, H, W = 2, 4, 16, 16
    KERNEL, GROUP = 5, 2

    x = jax.random.normal(kx, (N, C, H, W), dtype=jnp.float32)
    # deterministic init of Conv2d(dim, group*kernel, 1, bias=False) weight
    conv_w = (jax.random.normal(kw, (GROUP * KERNEL, C, 1, 1), dtype=jnp.float32)
              * (1.0 / jnp.sqrt(C)))

    out = spatial_strip_att_pallas(x, conv_w, kernel=KERNEL, group=GROUP)
    out = jax.block_until_ready(out)

    ref = spatial_strip_att_reference(x, conv_w, kernel=KERNEL, group=GROUP)
    assert out.shape == (N, C, H, W)
    assert jnp.allclose(out, ref, atol=1e-5, rtol=1e-5), "mismatch vs reference"

    print("KERNEL_OK")
</pallas_src>

<mosaic_0001>
module attributes {stable_mosaic.version = 11 : i64} {
  func.func @kernel(%arg0: i32, %arg1: i32, %arg2: i32, %arg3: memref<20xf32, #tpu.memory_space<smem>>, %arg4: memref<1x1x2x256xf32, #tpu.memory_space<vmem>>, %arg5: memref<1x1x2x256xf32, #tpu.memory_space<vmem>>) attributes {dimension_semantics = [#tpu.dimension_semantics<parallel>, #tpu.dimension_semantics<parallel>, #tpu.dimension_semantics<parallel>], iteration_bounds = array<i64: 2, 2, 1>, scalar_prefetch = 1 : i64, scratch_operands = 0 : i64, tpu.core_type = #tpu.core_type<tc>, window_params = [{transform_indices = @transform_0, window_bounds = array<i64: 1, 1, 2, 256>}, {transform_indices = @transform_1, window_bounds = array<i64: 1, 1, 2, 256>}]} {
    %c2_i32 = arith.constant 2 : i32
    %0 = arith.muli %arg0, %c2_i32 : i32
    %1 = arith.addi %0, %arg1 : i32
    %c5_i32 = arith.constant 5 : i32
    %2 = arith.muli %1, %c5_i32 : i32
    %c0_i32 = arith.constant 0 : i32
    %3 = arith.addi %2, %c0_i32 : i32
    %4 = arith.index_cast %3 : i32 to index
    %5 = memref.load %arg3[%4] : memref<20xf32, #tpu.memory_space<smem>>
    %c1_i32 = arith.constant 1 : i32
    %6 = arith.addi %2, %c1_i32 : i32
    %7 = arith.index_cast %6 : i32 to index
    %8 = memref.load %arg3[%7] : memref<20xf32, #tpu.memory_space<smem>>
    %c2_i32_0 = arith.constant 2 : i32
    %9 = arith.addi %2, %c2_i32_0 : i32
    %10 = arith.index_cast %9 : i32 to index
    %11 = memref.load %arg3[%10] : memref<20xf32, #tpu.memory_space<smem>>
    %c3_i32 = arith.constant 3 : i32
    %12 = arith.addi %2, %c3_i32 : i32
    %13 = arith.index_cast %12 : i32 to index
    %14 = memref.load %arg3[%13] : memref<20xf32, #tpu.memory_space<smem>>
    %c4_i32 = arith.constant 4 : i32
    %15 = arith.addi %2, %c4_i32 : i32
    %16 = arith.index_cast %15 : i32 to index
    %17 = memref.load %arg3[%16] : memref<20xf32, #tpu.memory_space<smem>>
    %c0 = arith.constant 0 : index
    %c0_1 = arith.constant 0 : index
    %c0_2 = arith.constant 0 : index
    %c0_3 = arith.constant 0 : index
    %18 = vector.load %arg4[%c0, %c0_1, %c0_2, %c0_3] : memref<1x1x2x256xf32, #tpu.memory_space<vmem>>, vector<1x1x2x256xf32>
    %19 = vector.shape_cast %18 : vector<1x1x2x256xf32> to vector<2x256xf32>
    %20 = tpu.iota {dimensions = array<i32: 1>} : vector<1x256xi32>
    %c16_i32 = arith.constant 16 : i32
    %c0_i32_4 = arith.constant 0 : i32
    %21 = arith.cmpi eq, %c16_i32, %c0_i32_4 : i32
    %c1_i32_5 = arith.constant 1 : i32
    %22 = arith.select %21, %c1_i32_5, %c16_i32 : i32
    %23 = vector.broadcast %22 : i32 to vector<1x256xi32>
    %24 = arith.remsi %20, %23 : vector<1x256xi32>
    %c0_i32_6 = arith.constant 0 : i32
    %25 = vector.broadcast %c0_i32_6 : i32 to vector<1x256xi32>
    %26 = arith.cmpi ne, %24, %25 : vector<1x256xi32>
    %c0_i32_7 = arith.constant 0 : i32
    %27 = vector.broadcast %c0_i32_7 : i32 to vector<1x256xi32>
    %28 = arith.cmpi slt, %24, %27 : vector<1x256xi32>
    %c0_i32_8 = arith.constant 0 : i32
    %29 = arith.cmpi slt, %22, %c0_i32_8 : i32
    %30 = vector.broadcast %29 : i1 to vector<1x256xi1>
    %31 = vector.broadcast %30 : vector<1x256xi1> to vector<1x256xi1>
    %32 = arith.xori %28, %31 : vector<1x256xi1>
    %33 = arith.andi %32, %26 : vector<1x256xi1>
    %34 = vector.broadcast %22 : i32 to vector<1x256xi32>
    %35 = arith.addi %24, %34 : vector<1x256xi32>
    %36 = arith.select %33, %35, %24 : vector<1x256xi1>, vector<1x256xi32>
    %37 = vector.broadcast %5 : f32 to vector<1x256xf32>
    %c0_i32_9 = arith.constant 0 : i32
    %38 = vector.broadcast %c0_i32_9 : i32 to vector<1x256xi32>
    %39 = arith.cmpi eq, %36, %38 : vector<1x256xi32>
    %cst = arith.constant 0.000000e+00 : f32
    %40 = vector.broadcast %cst : f32 to vector<1x256xf32>
    %41 = arith.select %39, %40, %37 : vector<1x256xi1>, vector<1x256xf32>
    %c1_i32_10 = arith.constant 1 : i32
    %42 = vector.broadcast %c1_i32_10 : i32 to vector<1x256xi32>
    %43 = arith.cmpi eq, %36, %42 : vector<1x256xi32>
    %cst_11 = arith.constant 0.000000e+00 : f32
    %44 = vector.broadcast %cst_11 : f32 to vector<1x256xf32>
    %45 = arith.select %43, %44, %41 : vector<1x256xi1>, vector<1x256xf32>
    %cst_12 = arith.constant 0.000000e+00 : f32
    %46 = arith.addf %cst_12, %5 : f32
    %47 = arith.addf %46, %17 : f32
    %c15_i32 = arith.constant 15 : i32
    %48 = vector.broadcast %c15_i32 : i32 to vector<1x256xi32>
    %49 = arith.cmpi eq, %36, %48 : vector<1x256xi32>
    %50 = vector.broadcast %47 : f32 to vector<1x256xf32>
    %51 = arith.select %49, %50, %45 : vector<1x256xi1>, vector<1x256xf32>
    %c2_i32_13 = arith.constant 2 : i32
    %52 = tpu.dynamic_rotate %19 by %c2_i32_13 dim 1 : vector<2x256xf32>, i32 -> vector<2x256xf32>
    %53 = vector.broadcast %51 : vector<1x256xf32> to vector<2x256xf32>
    %54 = arith.mulf %53, %52 : vector<2x256xf32>
    %55 = vector.broadcast %8 : f32 to vector<1x256xf32>
    %c0_i32_14 = arith.constant 0 : i32
    %56 = vector.broadcast %c0_i32_14 : i32 to vector<1x256xi32>
    %57 = arith.cmpi eq, %36, %56 : vector<1x256xi32>
    %cst_15 = arith.constant 0.000000e+00 : f32
    %58 = vector.broadcast %cst_15 : f32 to vector<1x256xf32>
    %59 = arith.select %57, %58, %55 : vector<1x256xi1>, vector<1x256xf32>
    %cst_16 = arith.constant 0.000000e+00 : f32
    %60 = arith.addf %cst_16, %8 : f32
    %61 = arith.addf %60, %14 : f32
    %c15_i32_17 = arith.constant 15 : i32
    %62 = vector.broadcast %c15_i32_17 : i32 to vector<1x256xi32>
    %63 = arith.cmpi eq, %36, %62 : vector<1x256xi32>
    %64 = vector.broadcast %61 : f32 to vector<1x256xf32>
    %65 = arith.select %63, %64, %59 : vector<1x256xi1>, vector<1x256xf32>
    %c1_i32_18 = arith.constant 1 : i32
    %66 = tpu.dynamic_rotate %19 by %c1_i32_18 dim 1 : vector<2x256xf32>, i32 -> vector<2x256xf32>
    %67 = vector.broadcast %65 : vector<1x256xf32> to vector<2x256xf32>
    %68 = arith.mulf %67, %66 : vector<2x256xf32>
    %69 = arith.addf %54, %68 : vector<2x256xf32>
    %70 = vector.broadcast %11 : f32 to vector<1x256xf32>
    %cst_19 = arith.constant 0.000000e+00 : f32
    %71 = arith.addf %cst_19, %5 : f32
    %72 = arith.addf %71, %11 : f32
    %c1_i32_20 = arith.constant 1 : i32
    %73 = vector.broadcast %c1_i32_20 : i32 to vector<1x256xi32>
    %74 = arith.cmpi eq, %36, %73 : vector<1x256xi32>
    %75 = vector.broadcast %72 : f32 to vector<1x256xf32>
    %76 = arith.select %74, %75, %70 : vector<1x256xi1>, vector<1x256xf32>
    %cst_21 = arith.constant 0.000000e+00 : f32
    %77 = arith.addf %cst_21, %11 : f32
    %78 = arith.addf %77, %17 : f32
    %c14_i32 = arith.constant 14 : i32
    %79 = vector.broadcast %c14_i32 : i32 to vector<1x256xi32>
    %80 = arith.cmpi eq, %36, %79 : vector<1x256xi32>
    %81 = vector.broadcast %78 : f32 to vector<1x256xf32>
    %82 = arith.select %80, %81, %76 : vector<1x256xi1>, vector<1x256xf32>
    %83 = vector.broadcast %82 : vector<1x256xf32> to vector<2x256xf32>
    %84 = arith.mulf %83, %19 : vector<2x256xf32>
    %85 = arith.addf %69, %84 : vector<2x256xf32>
    %86 = vector.broadcast %14 : f32 to vector<1x256xf32>
    %cst_22 = arith.constant 0.000000e+00 : f32
    %87 = arith.addf %cst_22, %8 : f32
    %88 = arith.addf %87, %14 : f32
    %c0_i32_23 = arith.constant 0 : i32
    %89 = vector.broadcast %c0_i32_23 : i32 to vector<1x256xi32>
    %90 = arith.cmpi eq, %36, %89 : vector<1x256xi32>
    %91 = vector.broadcast %88 : f32 to vector<1x256xf32>
    %92 = arith.select %90, %91, %86 : vector<1x256xi1>, vector<1x256xf32>
    %c15_i32_24 = arith.constant 15 : i32
    %93 = vector.broadcast %c15_i32_24 : i32 to vector<1x256xi32>
    %94 = arith.cmpi eq, %36, %93 : vector<1x256xi32>
    %cst_25 = arith.constant 0.000000e+00 : f32
    %95 = vector.broadcast %cst_25 : f32 to vector<1x256xf32>
    %96 = arith.select %94, %95, %92 : vector<1x256xi1>, vector<1x256xf32>
    %c255_i32 = arith.constant 255 : i32
    %97 = tpu.dynamic_rotate %19 by %c255_i32 dim 1 : vector<2x256xf32>, i32 -> vector<2x256xf32>
    %98 = vector.broadcast %96 : vector<1x256xf32> to vector<2x256xf32>
    %99 = arith.mulf %98, %97 : vector<2x256xf32>
    %100 = arith.addf %85, %99 : vector<2x256xf32>
    %101 = vector.broadcast %17 : f32 to vector<1x256xf32>
    %cst_26 = arith.constant 0.000000e+00 : f32
    %102 = arith.addf %cst_26, %5 : f32
    %103 = arith.addf %102, %17 : f32
    %c0_i32_27 = arith.constant 0 : i32
    %104 = vector.broadcast %c0_i32_27 : i32 to vector<1x256xi32>
    %105 = arith.cmpi eq, %36, %104 : vector<1x256xi32>
    %106 = vector.broadcast %103 : f32 to vector<1x256xf32>
    %107 = arith.select %105, %106, %101 : vector<1x256xi1>, vector<1x256xf32>
    %c14_i32_28 = arith.constant 14 : i32
    %108 = vector.broadcast %c14_i32_28 : i32 to vector<1x256xi32>
    %109 = arith.cmpi eq, %36, %108 : vector<1x256xi32>
    %cst_29 = arith.constant 0.000000e+00 : f32
    %110 = vector.broadcast %cst_29 : f32 to vector<1x256xf32>
    %111 = arith.select %109, %110, %107 : vector<1x256xi1>, vector<1x256xf32>
    %c15_i32_30 = arith.constant 15 : i32
    %112 = vector.broadcast %c15_i32_30 : i32 to vector<1x256xi32>
    %113 = arith.cmpi eq, %36, %112 : vector<1x256xi32>
    %cst_31 = arith.constant 0.000000e+00 : f32
    %114 = vector.broadcast %cst_31 : f32 to vector<1x256xf32>
    %115 = arith.select %113, %114, %111 : vector<1x256xi1>, vector<1x256xf32>
    %c254_i32 = arith.constant 254 : i32
    %116 = tpu.dynamic_rotate %19 by %c254_i32 dim 1 : vector<2x256xf32>, i32 -> vector<2x256xf32>
    %117 = vector.broadcast %115 : vector<1x256xf32> to vector<2x256xf32>
    %118 = arith.mulf %117, %116 : vector<2x256xf32>
    %119 = arith.addf %100, %118 : vector<2x256xf32>
    %c0_32 = arith.constant 0 : index
    %c0_33 = arith.constant 0 : index
    %c0_34 = arith.constant 0 : index
    %c0_35 = arith.constant 0 : index
    %120 = vector.load %arg5[%c0_32, %c0_33, %c0_34, %c0_35] : memref<1x1x2x256xf32, #tpu.memory_space<vmem>>, vector<1x1x2x256xf32>
    %121 = vector.shape_cast %120 : vector<1x1x2x256xf32> to vector<2x256xf32>
    %122 = vector.shape_cast %119 : vector<2x256xf32> to vector<1x1x2x256xf32>
    tpu.vector_store %arg5[%c0_32, %c0_33, %c0_34, %c0_35], %122 {strides = array<i32>} : memref<1x1x2x256xf32, #tpu.memory_space<vmem>>, vector<1x1x2x256xf32>,
    return
  }
  func.func @transform_0(%arg0: i32, %arg1: i32, %arg2: i32, %arg3: memref<20xf32, #tpu.memory_space<smem>>) -> (i32, i32, i32, i32) {
    %c0_i32 = arith.constant 0 : i32
    %c0_i32_0 = arith.constant 0 : i32
    return %arg0, %arg1, %arg2, %c0_i32 : i32, i32, i32, i32
  }
  func.func @transform_1(%arg0: i32, %arg1: i32, %arg2: i32, %arg3: memref<20xf32, #tpu.memory_space<smem>>) -> (i32, i32, i32, i32) {
    %c0_i32 = arith.constant 0 : i32
    %c0_i32_0 = arith.constant 0 : i32
    return %arg0, %arg1, %arg2, %c0_i32 : i32, i32, i32, i32
  }
}

</mosaic_0001>

<llo_original>
// kernel: tpu_custom_call.1
$region0: #{tpu_custom_call.1}
  #allocation0 [shape = 'u32[]', space=smem, size = 0x4, offset = 0x4, fixed_abs, tag = 'smem constant byte address 0x4 - core index']
  #allocation1 [shape = 'u32[144,128]{1,0:T(1,128)}', space=vmem, size = 0x12000, scoped, tag = 'internal scratch']
  #allocation2 [shape = 's32[1]{0}', space=sflag, size = 0x4, scoped, tag = 'scoped memory for tpu_custom_call.1']
  #allocation3 [shape = 'u8[512]{0}', space=smem, size = 0x200, scoped, tag = 'prefetched SMEM operand 0']
  %s0 = inlined_call_operand.hbm [shape: f32[20], index: 0, kind: input, shape index: {}]
  %s1 = inlined_call_operand.hbm [shape: f32[2,2,2,256], index: 1, kind: input, shape index: {}]
  %s2 = inlined_call_operand.hbm [shape: f32[2,2,2,256], index: 2, kind: output, shape index: {}]
  %s3 = sld [smem:[#allocation0]]
  $region41: #{tpu_custom_call.1} parent=0
    _
  %s5 = ssub.s32 1, %s3
  %s6 = scalar_select 0, %s5, %s3
  %8 = dma.hbm_to_smem %s0, 16, [#allocation3], [#allocation2]
  %9 = dma.done [#allocation2], 16
  %10 = sfence
  $region1: #{tpu_custom_call.1} parent=0
    #allocation4 [shape = 'u8[4096]{0}', space=vmem, size = 0x1000, scoped, tag = 'input window, operand 1']
    #allocation5 [shape = 's32[2]{0}', space=sflag, size = 0x8, scoped, tag = 'scoped memory for tpu_custom_call.1']
    #allocation6 [shape = 's32[2]{0}', space=sflag, size = 0x8, scoped, tag = 'scoped memory for tpu_custom_call.1']
    #allocation7 [shape = 'u8[4096]{0}', space=vmem, size = 0x1000, scoped, tag = 'output window, operand 0']
    %11 = vsyncpa [#allocation5], 0
    %s12 = scalar_lea.sflag [#allocation5], 1
    %13 = vsyncpa %s12, 0
    %14 = vsyncpa [#allocation6], 0
    %s15 = scalar_lea.sflag [#allocation6], 1
    %16 = vsyncpa %s15, 0
    loop: start=0, step=1, limit=6
    $region2: #{tpu_custom_call.1} parent=1 // loop_pre_header
      _
    $region3: #{tpu_custom_call.1} parent=1 // loop_header
      %s18 = sphi 0, %s22
      %p19 = scmp.ge.s32.totalorder %s18, 6
      %s25 = sphi 0, %s44
      %s26 = sphi 0, %s40
      %s27 = sphi 0, %s36
      %s28 = sphi 0, %s25
      %s29 = sphi 0, %s26
      %s30 = sphi 0, %s27
      %s31 = sphi 0, %s28
      %s32 = sphi 0, %s29
      %s33 = sphi 0, %s30
      %s51 = sphi 0, %s53
      %s54 = sphi 0, %s51
      %s55 = sphi 0, %s54
      %s71 = sphi 0, %s55
      %s81 = sphi 0, %s83
      %s84 = sphi 0, %s81
      %s85 = sphi 0, %s84
      %s101 = sphi 0, %s85
    $region4: #{tpu_custom_call.1} parent=1 // loop_header_branch
      %21 = sbr.rel (%p19) target = $region8
    $region5: #{tpu_custom_call.1} parent=1 // loop_body
      %s23 = ssub.s32 %s18, 1
      %s24 = ssub.s32 %s18, 2
      %s34 = sadd.s32 1, %s27
      %p35 = scmp.ge.s32.totalorder %s34, 1
      %s36 = scalar_select %p35, 0, %s34
      %s37 = sadd.s32 1, %s26
      %s38 = scalar_select %p35, %s37, %s26
      %p39 = scmp.ge.s32.totalorder %s38, 2
      %s40 = scalar_select %p39, 0, %s38
      %s41 = sadd.s32 1, %s25
      %s42 = scalar_select %p39, %s41, %s25
      %p43 = scmp.ge.s32.totalorder %s42, 2
      %s44 = scalar_select %p43, 0, %s42
      %s45 = ssub.s32 %s25, %s44
      %s46 = ssub.s32 %s26, %s40
      %s47 = sor.u32 %s45, %s46
      %s48 = ssub.s32 %s27, %s36
      %s49 = sor.u32 %s47, %s48
      %p50 = scmp.eq.s32.totalorder %s49, 0
      %s52 = sadd.s32 %s51, 1
      %s53 = scalar_select %p50, %s51, %s52
      %p56 = pneg %p50
      %p57 = scmp.eq.s32.totalorder %s18, 3
      %p58 = por %p56, %p57
      %p59 = scmp.ne.s32.totalorder %s51, %s54
      %p60 = scmp.eq.s32.totalorder %s18, 0
      %p61 = por %p59, %p60
      %p62 = scmp.ne.s32.totalorder %s51, %s54
      %p63 = scmp.eq.s32.totalorder %s23, 3
      %p64 = por %p62, %p63
      %p65 = scmp.ne.s32.totalorder %s54, %s55
      %p66 = scmp.eq.s32.totalorder %s23, 0
      %p67 = por %p65, %p66
      %p68 = scmp.ne.s32.totalorder %s54, %s55
      %p69 = scmp.eq.s32.totalorder %s24, 3
      %p70 = por %p68, %p69
      %p72 = scmp.ne.s32.totalorder %s55, %s71
      %p73 = scmp.eq.s32.totalorder %s24, 0
      %p74 = por %p72, %p73
      %s75 = ssub.s32 %s25, %s44
      %s76 = ssub.s32 %s26, %s40
      %s77 = sor.u32 %s75, %s76
      %s78 = ssub.s32 %s27, %s36
      %s79 = sor.u32 %s77, %s78
      %p80 = scmp.eq.s32.totalorder %s79, 0
      %s82 = sadd.s32 %s81, 1
      %s83 = scalar_select %p80, %s81, %s82
      %p86 = pneg %p80
      %p87 = scmp.eq.s32.totalorder %s18, 3
      %p88 = por %p86, %p87
      %p89 = scmp.ne.s32.totalorder %s81, %s84
      %p90 = scmp.eq.s32.totalorder %s18, 0
      %p91 = por %p89, %p90
      %p92 = scmp.ne.s32.totalorder %s81, %s84
      %p93 = scmp.eq.s32.totalorder %s23, 3
      %p94 = por %p92, %p93
      %p95 = scmp.ne.s32.totalorder %s84, %s85
      %p96 = scmp.eq.s32.totalorder %s23, 0
      %p97 = por %p95, %p96
      %p98 = scmp.ne.s32.totalorder %s84, %s85
      %p99 = scmp.eq.s32.totalorder %s24, 3
      %p100 = por %p98, %p99
      %p102 = scmp.ne.s32.totalorder %s85, %s101
      %p103 = scmp.eq.s32.totalorder %s24, 0
      %p104 = por %p102, %p103
      %p105 = scmp.le.s32.totalorder 1, %s18
      %p106 = scmp.lt.s32.totalorder %s18, 5
      %p107 = pnand %p105, %p106
      %p108 = pneg %p107
      // Predicated region
      $region9: #{tpu_custom_call.1} parent=5 // pred_check
        _
      $region10: #{tpu_custom_call.1} parent=5 // pred_check_branch
        %110 = sbr.rel (%p107) target = $region12
      $region11: #{tpu_custom_call.1} parent=5 // pred_region
        %s111 = ssub.s32 %s18, 1
      $region12: #{tpu_custom_call.1} parent=5 // pred_fallthru
        _
      %p112 = scmp.lt.s32.totalorder %s18, 4
      // Predicated region
      $region13: #{tpu_custom_call.1} parent=5 // pred_check
        %p113 = pneg %p112
      $region14: #{tpu_custom_call.1} parent=5 // pred_check_branch
        %115 = sbr.rel (%p113) target = $region16
      $region15: #{tpu_custom_call.1} parent=5 // pred_region
        // Predicated region
        $region17: #{tpu_custom_call.1} parent=15 // pred_check
          %p116 = pneg %p61
        $region18: #{tpu_custom_call.1} parent=15 // pred_check_branch
          %118 = sbr.rel (%p116) target = $region20
        $region19: #{tpu_custom_call.1} parent=15 // pred_region
          %s119 = sand.u32 %s51, 1
          %s120 = scalar_lea.sflag [#allocation5], %s119
          %s121 = sand.u32 %s51, 1
          %s122 = smul.addr %s121, 4
          %s123 = scalar_lea.vmem [#allocation4], %s122
          %s125 = ssub.s32 64, 64
          %126 = vsyncadd %s120, %s125
          %s127 = smul.addr %s27, 2
          %s128 = smul.addr %s26, 2
          %s129 = sadd.s32 %s127, %s128
          %s130 = smul.addr %s25, 4
          %s131 = sadd.s32 %s129, %s130
          %s132 = smul.addr %s131, 32
          %s133 = scalar_lea.hbm %s1, %s132
          %s135 = sshll.u32 %s123, 4
          %s136 = int_to_ptr.vmem [resolvable:$true] %s135
          %138 = dma.hbm_to_vmem [thread:$0]  %s133, 64, %s136, %s120
        $region20: #{tpu_custom_call.1} parent=15 // pred_fallthru
          _
      $region16: #{tpu_custom_call.1} parent=5 // pred_fallthru
        _
      %p139 = scmp.le.s32.totalorder 1, %s18
      %p140 = scmp.lt.s32.totalorder %s18, 5
      %p141 = pnand %p139, %p140
      %p142 = pneg %p141
      // Predicated region
      $region21: #{tpu_custom_call.1} parent=5 // pred_check
        _
      $region22: #{tpu_custom_call.1} parent=5 // pred_check_branch
        %144 = sbr.rel (%p141) target = $region24
      $region23: #{tpu_custom_call.1} parent=5 // pred_region
        %s145 = ssub.s32 %s18, 1
        %s146 = sand.u32 %s54, 1
        %s147 = scalar_lea.sflag [#allocation5], %s146
        %s148 = sand.u32 %s54, 1
        %s149 = smul.addr %s148, 4
        %s150 = scalar_lea.vmem [#allocation4], %s149
        // Predicated region
        $region25: #{tpu_custom_call.1} parent=23 // pred_check
          %p151 = pneg %p67
        $region26: #{tpu_custom_call.1} parent=23 // pred_check_branch
          %153 = sbr.rel (%p151) target = $region28
        $region27: #{tpu_custom_call.1} parent=23 // pred_region
          %154 = dma.done %s147, 64
        $region28: #{tpu_custom_call.1} parent=23 // pred_fallthru
          _
        %s155 = sand.u32 %s54, 1
        %s156 = scalar_lea.sflag [#allocation5], %s155
        %s157 = sand.u32 %s54, 1
        %s158 = smul.addr %s157, 4
        %s159 = scalar_lea.vmem [#allocation4], %s158
        %p160 = pneg %p67
        %p161 = pneg %p64
        %p162 = pneg %p97
        %p163 = pneg %p94
        %s164 = sand.u32 %s84, 1
        %s165 = scalar_lea.sflag [#allocation6], %s164
        %s166 = sand.u32 %s84, 1
        %s167 = smul.addr %s166, 4
        %s168 = scalar_lea.vmem [#allocation7], %s167
        %s169 = smul.u32 %s28, 2
        %s170 = sadd.s32 %s169, %s29
        %s171 = smul.u32 %s170, 5
        %s172 = sld [smem:[#allocation3 + %s171]]
        %s173 = sadd.s32 %s171, 1
        %s174 = sld [smem:[#allocation3 + %s173]]
        %s175 = sadd.s32 %s171, 2
        %s176 = sld [smem:[#allocation3 + %s175]]
        %s177 = sadd.s32 %s171, 3
        %s178 = sld [smem:[#allocation3 + %s177]]
        %s179 = sadd.s32 %s171, 4
        %s180 = sld [smem:[#allocation3 + %s179]]
        %v181 = vld [vmem:[%s150] sm:$0xf]
        %v182 = vlaneseq
        %v183 = vand.u32 %v182, 127
        %v184 = vadd.s32 %v183, 128
        %vm185 = vcmp.lt.s32.totalorder %v183, 0
        %v186 = vsub.s32 0, %v183
        %v187 = vsel %vm185, %v186, %v183
        %v188 = vshrl.u32 %v187, 4
        %v189 = vand.u32 %v187, 15
        %v190 = vsub.s32 0, %v189
        %v191 = vsel %vm185, %v190, %v189
        %vm192 = vcmp.lt.s32.totalorder %v184, 0
        %v193 = vsub.s32 0, %v184
        %v194 = vsel %vm192, %v193, %v184
        %v195 = vshrl.u32 %v194, 4
        %v196 = vand.u32 %v194, 15
        %v197 = vsub.s32 0, %v196
        %v198 = vsel %vm192, %v197, %v196
        %vm199 = vcmp.ne.s32.totalorder %v191, 0
        %vm200 = vcmp.ne.s32.totalorder %v198, 0
        %vm201 = vcmp.lt.s32.totalorder %v191, 0
        %vm202 = vcmp.lt.s32.totalorder %v198, 0
        %vm203 = vmand %vm201, %vm199
        %vm204 = vmand %vm202, %vm200
        %v205 = vadd.s32 %v191, 16
        %v206 = vadd.s32 %v198, 16
        %v207 = vsel %vm203, %v205, %v191
        %v208 = vsel %vm204, %v206, %v198
        %v209 = vstv %s172
        %vm210 = vcmp.eq.s32.totalorder %v207, 0
        %vm211 = vcmp.eq.s32.totalorder %v208, 0
        %v212 = vsel %vm210, 0.0, %v209
        %v213 = vsel %vm211, 0.0, %v209
        %vm214 = vcmp.eq.s32.totalorder %v207, 1
        %vm215 = vcmp.eq.s32.totalorder %v208, 1
        %v216 = vsel %vm214, 0.0, %v212
        %v217 = vsel %vm215, 0.0, %v213
        %s218 = sadd.f32 %s172, 0.0
        %s219 = sadd.f32 %s218, %s180
        %vm220 = vcmp.eq.s32.totalorder %v207, 15
        %vm221 = vcmp.eq.s32.totalorder %v208, 15
        %v222 = vstv %s219
        %v223 = vsel %vm220, %v222, %v216
        %v224 = vsel %vm221, %v222, %v217
        %v227 = vunpack.c.l.s4 1983009808
        %v228 = vunpack.c.0.s8 %v227
        %v229 = vlaneseq
        %v230 = vshrl.u32 %v229, 7
        %v231 = vsub.s32 %v228, %v230
        %v232 = vrot.slane %v181, %v231
        %v233 = vcombine.high %v232, %v232
        %236 = vrot.lane.b32.xlu0 %v232, 2
        %v237 = vpop.permute.xlu0 %236
        %238 = vrot.lane.b32.xlu0 %v233, 2
        %v239 = vpop.permute.xlu0 %238
        %vm240 = vcmp.lt.s32.totalorder %v183, 2
        %v241 = vsel %vm240, %v237, %v239
        %v242 = vsel %vm240, %v239, %v237
        %v243 = vmul.f32 %v223, %v242
        %v244 = vmul.f32 %v224, %v241
        %v245 = vstv %s174
        %v246 = vsel %vm210, 0.0, %v245
        %v247 = vsel %vm211, 0.0, %v245
        %s248 = sadd.f32 %s174, 0.0
        %s249 = sadd.f32 %s248, %s178
        %v250 = vstv %s249
        %v251 = vsel %vm220, %v250, %v246
        %v252 = vsel %vm221, %v250, %v247
        %253 = vrot.lane.b32.xlu0 %v232, 1
        %v254 = vpop.permute.xlu0 %253
        %255 = vrot.lane.b32.xlu0 %v233, 1
        %v256 = vpop.permute.xlu0 %255
        %vm257 = vcmp.lt.s32.totalorder %v183, 1
        %v258 = vsel %vm257, %v254, %v256
        %v259 = vsel %vm257, %v256, %v254
        %v260 = vmul.f32 %v251, %v259
        %v261 = vmul.f32 %v252, %v258
        %v262 = vadd.f32 %v243, %v260
        %v263 = vadd.f32 %v244, %v261
        %v264 = vstv %s176
        %s265 = sadd.f32 %s218, %s176
        %v266 = vstv %s265
        %v267 = vsel %vm214, %v266, %v264
        %v268 = vsel %vm215, %v266, %v264
        %s269 = sadd.f32 %s176, 0.0
        %s270 = sadd.f32 %s269, %s180
        %vm271 = vcmp.eq.s32.totalorder %v207, 14
        %vm272 = vcmp.eq.s32.totalorder %v208, 14
        %v273 = vstv %s270
        %v274 = vsel %vm271, %v273, %v267
        %v275 = vsel %vm272, %v273, %v268
        %v276 = vmul.f32 %v274, %v232
        %v277 = vmul.f32 %v275, %v233
        %v278 = vadd.f32 %v262, %v276
        %v279 = vadd.f32 %v263, %v277
        %v280 = vstv %s178
        %v281 = vsel %vm210, %v250, %v280
        %v282 = vsel %vm211, %v250, %v280
        %v283 = vsel %vm220, 0.0, %v281
        %v284 = vsel %vm221, 0.0, %v282
        %285 = vrot.lane.b32.xlu0 %v232, 127
        %v286 = vpop.permute.xlu0 %285
        %287 = vrot.lane.b32.xlu0 %v233, 127
        %v288 = vpop.permute.xlu0 %287
        %vm289 = vcmp.lt.s32.totalorder %v183, 127
        %v290 = vsel %vm289, %v286, %v288
        %v291 = vsel %vm289, %v288, %v286
        %v292 = vmul.f32 %v283, %v290
        %v293 = vmul.f32 %v284, %v291
        %v294 = vadd.f32 %v278, %v292
        %v295 = vadd.f32 %v279, %v293
        %v296 = vstv %s180
        %v297 = vsel %vm210, %v222, %v296
        %v298 = vsel %vm211, %v222, %v296
        %v299 = vsel %vm271, 0.0, %v297
        %v300 = vsel %vm272, 0.0, %v298
        %v301 = vsel %vm220, 0.0, %v299
        %v302 = vsel %vm221, 0.0, %v300
        %303 = vrot.lane.b32.xlu0 %v232, 126
        %v304 = vpop.permute.xlu0 %303
        %305 = vrot.lane.b32.xlu0 %v233, 126
        %v306 = vpop.permute.xlu0 %305
        %vm307 = vcmp.lt.s32.totalorder %v183, 126
        %v308 = vsel %vm307, %v304, %v306
        %v309 = vsel %vm307, %v306, %v304
        %v310 = vmul.f32 %v301, %v308
        %v311 = vmul.f32 %v302, %v309
        %v312 = vadd.f32 %v294, %v310
        %v313 = vadd.f32 %v295, %v311
        %v316 = vcombine.low %v312, %v313
        %v318 = vunpack.c.l.s4 1983009808
        %v319 = vunpack.c.0.s8 %v318
        %v320 = vlaneseq
        %v321 = vshrl.u32 %v320, 7
        %v322 = vsub.s32 %v319, %v321
        %v323 = vrot.slane %v316, %v322
        %325 = vst [vmem:[%s168] sm:$0xf] %v323
        %s326 = sand.u32 %s84, 1
        %s327 = scalar_lea.sflag [#allocation6], %s326
        %s328 = sand.u32 %s84, 1
        %s329 = smul.addr %s328, 4
        %s330 = scalar_lea.vmem [#allocation7], %s329
        // Predicated region
        $region29: #{tpu_custom_call.1} parent=23 // pred_check
          %p331 = pneg %p94
        $region30: #{tpu_custom_call.1} parent=23 // pred_check_branch
          %333 = sbr.rel (%p331) target = $region32
        $region31: #{tpu_custom_call.1} parent=23 // pred_region
          %s335 = ssub.s32 64, 64
          %336 = vsyncadd %s327, %s335
          %s337 = smul.addr %s30, 2
          %s338 = smul.addr %s29, 2
          %s339 = sadd.s32 %s337, %s338
          %s340 = smul.addr %s28, 4
          %s341 = sadd.s32 %s339, %s340
          %s342 = smul.addr %s341, 32
          %s343 = scalar_lea.hbm %s2, %s342
          %s345 = sshll.u32 %s330, 4
          %s346 = int_to_ptr.vmem [resolvable:$true] %s345
          %348 = dma.vmem_to_hbm [thread:$0]  %s346, 64, %s343, %s327
        $region32: #{tpu_custom_call.1} parent=23 // pred_fallthru
          _
      $region24: #{tpu_custom_call.1} parent=5 // pred_fallthru
        _
      %p349 = scmp.le.s32.totalorder 2, %s18
      // Predicated region
      $region33: #{tpu_custom_call.1} parent=5 // pred_check
        %p350 = pneg %p349
      $region34: #{tpu_custom_call.1} parent=5 // pred_check_branch
        %352 = sbr.rel (%p350) target = $region36
      $region35: #{tpu_custom_call.1} parent=5 // pred_region
        %s353 = ssub.s32 %s18, 2
        // Predicated region
        $region37: #{tpu_custom_call.1} parent=35 // pred_check
          %p354 = pneg %p100
        $region38: #{tpu_custom_call.1} parent=35 // pred_check_branch
          %356 = sbr.rel (%p354) target = $region40
        $region39: #{tpu_custom_call.1} parent=35 // pred_region
          %s357 = sand.u32 %s85, 1
          %s358 = scalar_lea.sflag [#allocation6], %s357
          %s359 = sand.u32 %s85, 1
          %s360 = smul.addr %s359, 4
          %s361 = scalar_lea.vmem [#allocation7], %s360
          %362 = dma.done %s358, 64
        $region40: #{tpu_custom_call.1} parent=35 // pred_fallthru
          _
      $region36: #{tpu_custom_call.1} parent=5 // pred_fallthru
        _
    $region6: #{tpu_custom_call.1} parent=1 // loop_footer
      %s22 = sadd.s32 1, %s18
    $region7: #{tpu_custom_call.1} parent=1 // loop_footer_branch
      %17 = sbr.rel target = $region3
    $region8: #{tpu_custom_call.1} parent=1 // loop_exit
      _
    %363 = vsyncpa [#allocation5], 1
    %s364 = scalar_lea.sflag [#allocation5], 1
    %365 = vsyncpa %s364, 1
    %366 = vsyncpa [#allocation6], 1
    %s367 = scalar_lea.sflag [#allocation6], 1
    %368 = vsyncpa %s367, 1

</llo_original>
